<compile_context>
chip_gen: v7x
topology: tpu7x:2x2x1
jax: 0.10.0
libtpu: 0.0.40
codegen_flags: <defaults>
</compile_context>

<pallas_src>
import functools

import jax
import jax.numpy as jnp
from jax.experimental import pallas as pl
from jax.experimental.pallas import tpu as pltpu

ALPHA = 0.1
EPS = 1e-8

_NC = 2            # core-group split for the reduction passes (v7x megacore; harmless on 1-TC chips)
_TB_CAP = 1024     # max rows per block (bounds unrolled sublane folds)
_TC_CAP = 4096     # max lanes per block (bounds unrolled lane folds)


# ---------------------------------------------------------------------------
# Small helpers
# ---------------------------------------------------------------------------
def _round_up(x, m):
    return ((x + m - 1) // m) * m


def _cdiv(a, b):
    return -(-a // b)


def _sublane_mult(dtype):
    # Packed min-tile sublane count: 8 (4B), 16 (2B), 32 (1B).
    return max(8, 32 // jnp.dtype(dtype).itemsize)


def _vmem_budgets():
    """(vmem_limit_bytes, streaming_byte_budget) derived from the chip's VMEM."""
    try:
        cap = int(pltpu.get_tpu_info().vmem_capacity_bytes)
    except Exception:                       # no TPU / older API: v7x-safe defaults
        cap = 64 * 1024 * 1024
    limit = min(cap * 3 // 4, 96 * 1024 * 1024)    # ~48 MiB on v7x, ~96 MiB on v5e/v6e
    budget = min(cap // 2, 64 * 1024 * 1024)       # ~32 MiB on v7x, ~64 MiB on v5e/v6e
    return limit, budget


def _pick_tiles(b, c, itemsizes, stream_budget, min_sub, split_rows,
                tile_rows=None, tile_cols=None):
    """Choose (tb, tc): tb multiple of min_sub, tc multiple of 128, within budget."""
    cp128 = _round_up(c, 128)
    bpe = sum(itemsizes)                               # bytes/elem across all streams

    # Column tile: largest 128-multiple divisor of the padded width within budget.
    if tile_cols is not None:
        tc = max(128, _round_up(int(tile_cols), 128))
    else:
        tc = 128
        m = cp128 // 128
        for d in range(min(m, _TC_CAP // 128), 0, -1):
            if m % d:
                continue
            cand = 128 * d
            if 2 * min_sub * cand * bpe <= stream_budget:   # 2 = double buffering
                tc = cand
                break

    # Row tile: fill the remaining budget, capped by the (aligned) row count.
    if tile_rows is not None:
        tb = max(min_sub, _round_up(int(tile_rows), min_sub))
    else:
        tb_max = stream_budget // (2 * tc * bpe)
        tb = max(min_sub, (tb_max // min_sub) * min_sub)
        tb = min(tb, _TB_CAP, _round_up(b, min_sub))
        if split_rows and (cp128 // tc) < 2:
            # Guarantee >=2 blocks so the "parallel" grid can use both v7x cores.
            b_al = _round_up(b, min_sub)
            if tb >= b_al and b_al >= 2 * min_sub:
                tb = _round_up(_cdiv(b_al, 2), min_sub)
    return tb, tc


def _as_2d(x):
    if x.ndim == 1:
        return x.reshape(1, -1)
    if x.ndim == 2:
        return x
    return x.reshape(-1, x.shape[-1])


def _pad2d(x, bp, cp):
    b, c = x.shape
    if b == bp and c == cp:
        return x
    return jnp.pad(x, ((0, bp - b), (0, cp - c)))


def _fold_to_vreg(x):
    """Reduce an (TB, TC) f32 tile to an (8, 128) partial using only VALU adds.

    Lane-aligned 128-wide column slices and sublane-aligned 8-row slices map to
    whole vregs, so every add is an elementwise vreg add (no XLU per tile)."""
    tb, tc = x.shape
    folded = x[:, 0:128]
    for j in range(1, tc // 128):
        folded = folded + x[:, j * 128:(j + 1) * 128]
    part = folded[0:8, :]
    for i in range(1, tb // 8):
        part = part + folded[i * 8:(i + 1) * 8, :]
    return part


# ---------------------------------------------------------------------------
# Kernels
# ---------------------------------------------------------------------------
def _sum_kernel(x_ref, out_ref, *, unused=None):
    """Partial sum of p per core-group: accumulate into a resident (1,8,128) block."""
    @pl.when((pl.program_id(1) == 0) & (pl.program_id(2) == 0))
    def _init():
        out_ref[...] = jnp.zeros_like(out_ref)

    x = x_ref[...].astype(jnp.float32)
    out_ref[...] += _fold_to_vreg(x).reshape(out_ref.shape)


def _kl_kernel(psum_ref, p_ref, a_ref, out_ref, *, eps):
    """Partial KL per core-group: sum(pn*(log(pn+eps)-log(a+eps))), pn = p*inv."""
    @pl.when((pl.program_id(1) == 0) & (pl.program_id(2) == 0))
    def _init():
        out_ref[...] = jnp.zeros_like(out_ref)

    inv = 1.0 / (jnp.sum(psum_ref[...]) + eps)          # exact reciprocal, in-kernel
    p = p_ref[...].astype(jnp.float32)
    a = a_ref[...].astype(jnp.float32)
    pn = p * inv
    term = pn * (jnp.log(pn + eps) - jnp.log(a + eps))
    out_ref[...] += _fold_to_vreg(term).reshape(out_ref.shape)


def _ce_kernel(kl_ref, x_ref, y_ref, o_ref, *, alpha):
    """Elementwise BCE-with-logits + alpha * (global KL from resident partials)."""
    kl = jnp.sum(kl_ref[...])                            # combine (NC,8,128) partials
    x = x_ref[...].astype(jnp.float32)
    y = y_ref[...].astype(jnp.float32)
    ce = jnp.maximum(x, 0.0) - x * y + jnp.log1p(jnp.exp(-jnp.abs(x)))
    o_ref[...] = (ce + alpha * kl).astype(o_ref.dtype)


# ---------------------------------------------------------------------------
# pallas_call wrappers
# ---------------------------------------------------------------------------
def _pallas_psum(p_pad, tb, tc, vmem_limit):
    bp, cp = p_pad.shape
    nb_r, nb_c = bp // tb, cp // tc
    rpc = nb_r // _NC
    return pl.pallas_call(
        functools.partial(_sum_kernel),
        out_shape=jax.ShapeDtypeStruct((_NC, 8, 128), jnp.float32),
        grid=(_NC, rpc, nb_c),
        in_specs=[pl.BlockSpec((tb, tc), lambda g, i, j: (g * rpc + i, j))],
        out_specs=pl.BlockSpec((1, 8, 128), lambda g, i, j: (g, 0, 0)),
        compiler_params=pltpu.CompilerParams(
            dimension_semantics=("parallel", "arbitrary", "arbitrary"),
            vmem_limit_bytes=vmem_limit),
    )(p_pad)


def _pallas_kl(psum_par, p_pad, a_pad, tb, tc, eps, vmem_limit):
    bp, cp = p_pad.shape
    nb_r, nb_c = bp // tb, cp // tc
    rpc = nb_r // _NC
    return pl.pallas_call(
        functools.partial(_kl_kernel, eps=float(eps)),
        out_shape=jax.ShapeDtypeStruct((_NC, 8, 128), jnp.float32),
        grid=(_NC, rpc, nb_c),
        in_specs=[pl.BlockSpec((_NC, 8, 128), lambda g, i, j: (0, 0, 0)),
                  pl.BlockSpec((tb, tc), lambda g, i, j: (g * rpc + i, j)),
                  pl.BlockSpec((tb, tc), lambda g, i, j: (g * rpc + i, j))],
        out_specs=pl.BlockSpec((1, 8, 128), lambda g, i, j: (g, 0, 0)),
        compiler_params=pltpu.CompilerParams(
            dimension_semantics=("parallel", "arbitrary", "arbitrary"),
            vmem_limit_bytes=vmem_limit),
    )(psum_par, p_pad, a_pad)


def _pallas_ce(x_pad, y_pad, kl_par, tb, tc, alpha, vmem_limit, out_dtype):
    bp, cp = x_pad.shape
    return pl.pallas_call(
        functools.partial(_ce_kernel, alpha=float(alpha)),
        out_shape=jax.ShapeDtypeStruct((bp, cp), out_dtype),
        grid=(bp // tb, cp // tc),
        in_specs=[pl.BlockSpec((_NC, 8, 128), lambda i, j: (0, 0, 0)),
                  pl.BlockSpec((tb, tc), lambda i, j: (i, j)),
                  pl.BlockSpec((tb, tc), lambda i, j: (i, j))],
        out_specs=pl.BlockSpec((tb, tc), lambda i, j: (i, j)),
        compiler_params=pltpu.CompilerParams(
            dimension_semantics=("parallel", "parallel"),
            vmem_limit_bytes=vmem_limit),
    )(kl_par, x_pad, y_pad)


# ---------------------------------------------------------------------------
# Public entry point
# ---------------------------------------------------------------------------
def ce_kl_div_loss(logits, labels, a=None, p=None, alpha=ALPHA, eps=EPS,
                   tile_rows=None, tile_cols=None):
    """Pallas implementation of CEKLDivLoss.forward."""
    orig_shape = logits.shape
    x = _as_2d(jnp.asarray(logits))
    y = _as_2d(jnp.asarray(labels))
    b, c = x.shape
    vmem_limit, stream_budget = _vmem_budgets()

    if p is None:
        kl_par = jnp.zeros((_NC, 8, 128), jnp.float32)      # alpha*0 == exact no-op
    else:
        p2 = _as_2d(jnp.asarray(p))
        a2 = _as_2d(jnp.asarray(a))
        br, cr = p2.shape
        items = (jnp.dtype(p2.dtype).itemsize, jnp.dtype(a2.dtype).itemsize)
        min_sub = max(_sublane_mult(p2.dtype), _sublane_mult(a2.dtype))
        tbr, tcr = _pick_tiles(br, cr, items, stream_budget, min_sub,
                               split_rows=False,
                               tile_rows=tile_rows, tile_cols=tile_cols)
        bp_r = _round_up(br, tbr * _NC)      # zero-padding is exact for both reductions
        cp_r = _round_up(cr, tcr)
        p_pad = _pad2d(p2, bp_r, cp_r)
        a_pad = _pad2d(a2, bp_r, cp_r)
        psum_par = _pallas_psum(p_pad, tbr, tcr, vmem_limit)             # (NC,8,128)
        kl_par = _pallas_kl(psum_par, p_pad, a_pad, tbr, tcr, eps, vmem_limit)

    items_ce = (jnp.dtype(x.dtype).itemsize, jnp.dtype(y.dtype).itemsize,
                jnp.dtype(x.dtype).itemsize)                 # logits + labels + out
    min_sub = max(_sublane_mult(x.dtype), _sublane_mult(y.dtype))
    tb, tc = _pick_tiles(b, c, items_ce, stream_budget, min_sub,
                         split_rows=True,
                         tile_rows=tile_rows, tile_cols=tile_cols)
    bp = _round_up(b, tb)
    cp = _round_up(c, tc)
    x_pad = _pad2d(x, bp, cp)
    y_pad = _pad2d(y, bp, cp)
    out = _pallas_ce(x_pad, y_pad, kl_par, tb, tc, alpha, vmem_limit, x.dtype)
    out = out[:b, :c]
    return out.reshape(orig_shape)


# ---------------------------------------------------------------------------
# Reference + test
# ---------------------------------------------------------------------------
def _reference(logits, labels, a, p=None, alpha=ALPHA, eps=EPS):
    ce = (jnp.maximum(logits, 0.0) - logits * labels
          + jnp.log1p(jnp.exp(-jnp.abs(logits))))
    if p is None:
        return ce
    pn = p / (p.sum() + eps)
    kl = jnp.sum(pn * jnp.log(pn + eps) - pn * jnp.log(a + eps))
    return ce + alpha * kl


if __name__ == "__main__":
    key = jax.random.PRNGKey(0)
    k1, k2, k3, k4 = jax.random.split(key, 4)

    B, C = 32, 256
    logits = jax.random.normal(k1, (B, C), dtype=jnp.float32)
    labels = jax.random.uniform(k2, (B, C), dtype=jnp.float32)       # soft targets
    a = jax.random.uniform(k3, (B, C), dtype=jnp.float32) + 0.05     # attention (>0)
    p = jax.random.uniform(k4, (B, C), dtype=jnp.float32) + 0.05     # probs (>0)

    ref = _reference(logits, labels, a, p)
    ref_ce = _reference(logits, labels, a, None)

    # Forced small tiles -> multi-block grids (exercise accumulation/pipelining).
    out_tiled = jax.block_until_ready(
        ce_kl_div_loss(logits, labels, a, p, tile_rows=8, tile_cols=128))
    # Auto-tiled path and CE-only path.
    out_auto = jax.block_until_ready(ce_kl_div_loss(logits, labels, a, p))
    out_ce = jax.block_until_ready(ce_kl_div_loss(logits, labels, a, None))

    # Ragged shape -> exercises the pad/slice path.
    Br, Cr = 30, 200
    logits_r = jax.random.normal(k1, (Br, Cr), dtype=jnp.float32)
    labels_r = jax.random.uniform(k2, (Br, Cr), dtype=jnp.float32)
    a_r = jax.random.uniform(k3, (Br, Cr), dtype=jnp.float32) + 0.05
    p_r = jax.random.uniform(k4, (Br, Cr), dtype=jnp.float32) + 0.05
    out_ragged = jax.block_until_ready(ce_kl_div_loss(logits_r, labels_r, a_r, p_r))
    ref_r = _reference(logits_r, labels_r, a_r, p_r)

    assert jnp.allclose(out_tiled, ref, rtol=1e-5, atol=1e-5)
    assert jnp.allclose(out_auto, ref, rtol=1e-5, atol=1e-5)
    assert jnp.allclose(out_ce, ref_ce, rtol=1e-5, atol=1e-5)
    assert jnp.allclose(out_ragged, ref_r, rtol=1e-5, atol=1e-5)

    print("KERNEL_OK")
</pallas_src>

<mosaic_0001>
module attributes {stable_mosaic.version = 11 : i64} {
  func.func @_sum_kernel(%arg0: i32, %arg1: i32, %arg2: i32, %arg3: memref<8x128xf32, #tpu.memory_space<vmem>>, %arg4: memref<1x8x128xf32, #tpu.memory_space<vmem>>) attributes {dimension_semantics = [#tpu.dimension_semantics<parallel>, #tpu.dimension_semantics<arbitrary>, #tpu.dimension_semantics<arbitrary>], iteration_bounds = array<i64: 2, 2, 2>, scalar_prefetch = 0 : i64, scratch_operands = 0 : i64, tpu.core_type = #tpu.core_type<tc>, window_params = [{transform_indices = @transform_0, window_bounds = array<i64: 8, 128>}, {transform_indices = @transform_1, window_bounds = array<i64: 1, 8, 128>}]} {
    %c0_i32 = arith.constant 0 : i32
    %0 = arith.cmpi eq, %arg1, %c0_i32 : i32
    %c0_i32_0 = arith.constant 0 : i32
    %1 = arith.cmpi eq, %arg2, %c0_i32_0 : i32
    %2 = arith.andi %0, %1 : i1
    %3 = arith.extui %2 : i1 to i32
    %c0_i32_1 = arith.constant 0 : i32
    %4 = arith.cmpi ne, %3, %c0_i32_1 : i32
    scf.if %4 {
      %cst = arith.constant 0.000000e+00 : f32
      %10 = vector.broadcast %cst : f32 to vector<1x8x128xf32>
      %c0_9 = arith.constant 0 : index
      %c0_10 = arith.constant 0 : index
      %c0_11 = arith.constant 0 : index
      %11 = vector.load %arg4[%c0_9, %c0_10, %c0_11] : memref<1x8x128xf32, #tpu.memory_space<vmem>>, vector<1x8x128xf32>
      tpu.vector_store %arg4[%c0_9, %c0_10, %c0_11], %10 {strides = array<i32>} : memref<1x8x128xf32, #tpu.memory_space<vmem>>, vector<1x8x128xf32>,
    } else {
    }
    %c0 = arith.constant 0 : index
    %c0_2 = arith.constant 0 : index
    %5 = vector.load %arg3[%c0, %c0_2] : memref<8x128xf32, #tpu.memory_space<vmem>>, vector<8x128xf32>
    %c0_3 = arith.constant 0 : index
    %c0_4 = arith.constant 0 : index
    %c0_5 = arith.constant 0 : index
    %6 = vector.load %arg4[%c0_3, %c0_4, %c0_5] : memref<1x8x128xf32, #tpu.memory_space<vmem>>, vector<1x8x128xf32>
    %7 = vector.shape_cast %5 : vector<8x128xf32> to vector<1x8x128xf32>
    %8 = arith.addf %6, %7 : vector<1x8x128xf32>
    %c0_6 = arith.constant 0 : index
    %c0_7 = arith.constant 0 : index
    %c0_8 = arith.constant 0 : index
    %9 = vector.load %arg4[%c0_6, %c0_7, %c0_8] : memref<1x8x128xf32, #tpu.memory_space<vmem>>, vector<1x8x128xf32>
    tpu.vector_store %arg4[%c0_6, %c0_7, %c0_8], %8 {strides = array<i32>} : memref<1x8x128xf32, #tpu.memory_space<vmem>>, vector<1x8x128xf32>,
    return
  }
  func.func @transform_0(%arg0: i32, %arg1: i32, %arg2: i32) -> (i32, i32) {
    %c2_i32 = arith.constant 2 : i32
    %0 = arith.muli %arg0, %c2_i32 : i32
    %1 = arith.addi %0, %arg1 : i32
    %c0_i32 = arith.constant 0 : i32
    return %1, %arg2 : i32, i32
  }
  func.func @transform_1(%arg0: i32, %arg1: i32, %arg2: i32) -> (i32, i32, i32) {
    %c0_i32 = arith.constant 0 : i32
    %c0_i32_0 = arith.constant 0 : i32
    %c0_i32_1 = arith.constant 0 : i32
    return %arg0, %c0_i32, %c0_i32_0 : i32, i32, i32
  }
}

</mosaic_0001>

<llo_original>
// kernel: tpu_custom_call.1
$region0: #{tpu_custom_call.1}
  #allocation0 [shape = 'u32[]', space=smem, size = 0x4, offset = 0x4, fixed_abs, tag = 'smem constant byte address 0x4 - core index']
  #allocation1 [shape = 'u32[144,128]{1,0:T(1,128)}', space=vmem, size = 0x12000, scoped, tag = 'internal scratch']
  %s0 = inlined_call_operand.hbm [shape: f32[32,256], index: 0, kind: input, shape index: {}]
  %s1 = inlined_call_operand.hbm [shape: f32[2,8,128], index: 1, kind: output, shape index: {}]
  %s2 = sld [smem:[#allocation0]]
  $region45: #{tpu_custom_call.1} parent=0
    _
  %s4 = ssub.s32 1, %s2
  %s5 = scalar_select 0, %s4, %s2
  $region1: #{tpu_custom_call.1} parent=0
    #allocation2 [shape = 'u8[8192]{0}', space=vmem, size = 0x2000, scoped, tag = 'input window, operand 0']
    #allocation3 [shape = 's32[2]{0}', space=sflag, size = 0x8, scoped, tag = 'scoped memory for tpu_custom_call.1']
    #allocation4 [shape = 's32[2]{0}', space=sflag, size = 0x8, scoped, tag = 'scoped memory for tpu_custom_call.1']
    #allocation5 [shape = 'u8[8192]{0}', space=vmem, size = 0x2000, scoped, tag = 'output window, operand 0']
    %6 = vsyncpa [#allocation3], 0
    %s7 = scalar_lea.sflag [#allocation3], 1
    %8 = vsyncpa %s7, 0
    %9 = vsyncpa [#allocation4], 0
    %s10 = scalar_lea.sflag [#allocation4], 1
    %11 = vsyncpa %s10, 0
    loop: start=0, step=1, limit=10
    $region2: #{tpu_custom_call.1} parent=1 // loop_pre_header
      _
    $region3: #{tpu_custom_call.1} parent=1 // loop_header
      %s13 = sphi 0, %s17
      %p14 = scmp.ge.s32.totalorder %s13, 10
      %s20 = sphi 0, %s39
      %s21 = sphi 0, %s35
      %s22 = sphi 0, %s31
      %s23 = sphi 0, %s20
      %s24 = sphi 0, %s21
      %s25 = sphi 0, %s22
      %s26 = sphi 0, %s23
      %s27 = sphi 0, %s24
      %s28 = sphi 0, %s25
      %s48 = sphi 0, %s50
      %s51 = sphi 0, %s48
      %s52 = sphi 0, %s51
      %s68 = sphi 0, %s52
      %s74 = sphi 0, %s76
      %s77 = sphi 0, %s74
      %s78 = sphi 0, %s77
      %s94 = sphi 0, %s78
    $region4: #{tpu_custom_call.1} parent=1 // loop_header_branch
      %16 = sbr.rel (%p14) target = $region8
    $region5: #{tpu_custom_call.1} parent=1 // loop_body
      %s18 = ssub.s32 %s13, 1
      %s19 = ssub.s32 %s13, 2
      %s29 = sadd.s32 1, %s22
      %p30 = scmp.ge.s32.totalorder %s29, 2
      %s31 = scalar_select %p30, 0, %s29
      %s32 = sadd.s32 1, %s21
      %s33 = scalar_select %p30, %s32, %s21
      %p34 = scmp.ge.s32.totalorder %s33, 2
      %s35 = scalar_select %p34, 0, %s33
      %s36 = sadd.s32 1, %s20
      %s37 = scalar_select %p34, %s36, %s20
      %p38 = scmp.ge.s32.totalorder %s37, 2
      %s39 = scalar_select %p38, 0, %s37
      %s40 = smul.u32 %s20, 2
      %s41 = sadd.s32 %s40, %s21
      %s42 = smul.u32 %s39, 2
      %s43 = sadd.s32 %s42, %s35
      %s44 = ssub.s32 %s41, %s43
      %s45 = ssub.s32 %s22, %s31
      %s46 = sor.u32 %s44, %s45
      %p47 = scmp.eq.s32.totalorder %s46, 0
      %s49 = sadd.s32 %s48, 1
      %s50 = scalar_select %p47, %s48, %s49
      %p53 = pneg %p47
      %p54 = scmp.eq.s32.totalorder %s13, 7
      %p55 = por %p53, %p54
      %p56 = scmp.ne.s32.totalorder %s48, %s51
      %p57 = scmp.eq.s32.totalorder %s13, 0
      %p58 = por %p56, %p57
      %p59 = scmp.ne.s32.totalorder %s48, %s51
      %p60 = scmp.eq.s32.totalorder %s18, 7
      %p61 = por %p59, %p60
      %p62 = scmp.ne.s32.totalorder %s51, %s52
      %p63 = scmp.eq.s32.totalorder %s18, 0
      %p64 = por %p62, %p63
      %p65 = scmp.ne.s32.totalorder %s51, %s52
      %p66 = scmp.eq.s32.totalorder %s19, 7
      %p67 = por %p65, %p66
      %p69 = scmp.ne.s32.totalorder %s52, %s68
      %p70 = scmp.eq.s32.totalorder %s19, 0
      %p71 = por %p69, %p70
      %s72 = ssub.s32 %s20, %s39
      %p73 = scmp.eq.s32.totalorder %s72, 0
      %s75 = sadd.s32 %s74, 1
      %s76 = scalar_select %p73, %s74, %s75
      %p79 = pneg %p73
      %p80 = scmp.eq.s32.totalorder %s13, 7
      %p81 = por %p79, %p80
      %p82 = scmp.ne.s32.totalorder %s74, %s77
      %p83 = scmp.eq.s32.totalorder %s13, 0
      %p84 = por %p82, %p83
      %p85 = scmp.ne.s32.totalorder %s74, %s77
      %p86 = scmp.eq.s32.totalorder %s18, 7
      %p87 = por %p85, %p86
      %p88 = scmp.ne.s32.totalorder %s77, %s78
      %p89 = scmp.eq.s32.totalorder %s18, 0
      %p90 = por %p88, %p89
      %p91 = scmp.ne.s32.totalorder %s77, %s78
      %p92 = scmp.eq.s32.totalorder %s19, 7
      %p93 = por %p91, %p92
      %p95 = scmp.ne.s32.totalorder %s78, %s94
      %p96 = scmp.eq.s32.totalorder %s19, 0
      %p97 = por %p95, %p96
      %p98 = scmp.le.s32.totalorder 1, %s13
      %p99 = scmp.lt.s32.totalorder %s13, 9
      %p100 = pnand %p98, %p99
      %p101 = pneg %p100
      // Predicated region
      $region9: #{tpu_custom_call.1} parent=5 // pred_check
        _
      $region10: #{tpu_custom_call.1} parent=5 // pred_check_branch
        %103 = sbr.rel (%p100) target = $region12
      $region11: #{tpu_custom_call.1} parent=5 // pred_region
        %s104 = ssub.s32 %s13, 1
      $region12: #{tpu_custom_call.1} parent=5 // pred_fallthru
        _
      %p105 = scmp.lt.s32.totalorder %s13, 8
      // Predicated region
      $region13: #{tpu_custom_call.1} parent=5 // pred_check
        %p106 = pneg %p105
      $region14: #{tpu_custom_call.1} parent=5 // pred_check_branch
        %108 = sbr.rel (%p106) target = $region16
      $region15: #{tpu_custom_call.1} parent=5 // pred_region
        // Predicated region
        $region17: #{tpu_custom_call.1} parent=15 // pred_check
          %p109 = pneg %p58
        $region18: #{tpu_custom_call.1} parent=15 // pred_check_branch
          %111 = sbr.rel (%p109) target = $region20
        $region19: #{tpu_custom_call.1} parent=15 // pred_region
          %s112 = sand.u32 %s48, 1
          %s113 = scalar_lea.sflag [#allocation3], %s112
          %s114 = sand.u32 %s48, 1
          %s115 = smul.addr %s114, 8
          %s116 = scalar_lea.vmem [#allocation2], %s115
          %s117 = smul.u32 %s20, 2
          %s118 = sadd.s32 %s117, %s21
          %s120 = ssub.s32 128, 128
          %121 = vsyncadd %s113, %s120
          %s122 = smul.addr %s118, 2
          %s123 = sadd.s32 %s22, %s122
          %s124 = smul.addr %s123, 128
          %s125 = scalar_lea.hbm %s0, %s124
          %s127 = sshll.u32 %s116, 4
          %s128 = int_to_ptr.vmem [resolvable:$true] %s127
          %130 = dma.hbm_to_vmem [thread:$0]  %s125, 128, %s128, %s113
        $region20: #{tpu_custom_call.1} parent=15 // pred_fallthru
          _
      $region16: #{tpu_custom_call.1} parent=5 // pred_fallthru
        _
      %p131 = scmp.le.s32.totalorder 1, %s13
      %p132 = scmp.lt.s32.totalorder %s13, 9
      %p133 = pnand %p131, %p132
      %p134 = pneg %p133
      // Predicated region
      $region21: #{tpu_custom_call.1} parent=5 // pred_check
        _
      $region22: #{tpu_custom_call.1} parent=5 // pred_check_branch
        %136 = sbr.rel (%p133) target = $region24
      $region23: #{tpu_custom_call.1} parent=5 // pred_region
        %s137 = ssub.s32 %s13, 1
        %s138 = sand.u32 %s51, 1
        %s139 = scalar_lea.sflag [#allocation3], %s138
        %s140 = sand.u32 %s51, 1
        %s141 = smul.addr %s140, 8
        %s142 = scalar_lea.vmem [#allocation2], %s141
        // Predicated region
        $region25: #{tpu_custom_call.1} parent=23 // pred_check
          %p143 = pneg %p64
        $region26: #{tpu_custom_call.1} parent=23 // pred_check_branch
          %145 = sbr.rel (%p143) target = $region28
        $region27: #{tpu_custom_call.1} parent=23 // pred_region
          %146 = dma.done %s139, 128
        $region28: #{tpu_custom_call.1} parent=23 // pred_fallthru
          _
        %s147 = sand.u32 %s51, 1
        %s148 = scalar_lea.sflag [#allocation3], %s147
        %s149 = sand.u32 %s51, 1
        %s150 = smul.addr %s149, 8
        %s151 = scalar_lea.vmem [#allocation2], %s150
        %p152 = pneg %p64
        %p153 = pneg %p61
        %p154 = pneg %p90
        %p155 = pneg %p87
        %s156 = sand.u32 %s77, 1
        %s157 = scalar_lea.sflag [#allocation4], %s156
        %s158 = sand.u32 %s77, 1
        %s159 = smul.addr %s158, 8
        %s160 = scalar_lea.vmem [#allocation5], %s159
        %s161 = smul.u32 %s23, 2
        %s162 = sadd.s32 %s161, %s24
        %p163 = scmp.eq.s32.totalorder %s24, 0
        %p164 = scmp.eq.s32.totalorder %s25, 0
        %p165 = pnand %p163, %p164
        %p166 = pneg %p165
        // Predicated region
        $region29: #{tpu_custom_call.1} parent=23 // pred_check
          _
        $region30: #{tpu_custom_call.1} parent=23 // pred_check_branch
          %168 = sbr.rel (%p165) target = $region32
        $region31: #{tpu_custom_call.1} parent=23 // pred_region
          %169 = vst [vmem:[%s160] sm:$0xff] 0.0
        $region32: #{tpu_custom_call.1} parent=23 // pred_fallthru
          _
        %v170 = vld [vmem:[%s142] sm:$0xff]
        %v171 = vld [vmem:[%s160] sm:$0xff]
        %v172 = vadd.f32 %v171, %v170
        %173 = vst [vmem:[%s160] sm:$0xff] %v172
        %s174 = sand.u32 %s77, 1
        %s175 = scalar_lea.sflag [#allocation4], %s174
        %s176 = sand.u32 %s77, 1
        %s177 = smul.addr %s176, 8
        %s178 = scalar_lea.vmem [#allocation5], %s177
        // Predicated region
        $region33: #{tpu_custom_call.1} parent=23 // pred_check
          %p179 = pneg %p87
        $region34: #{tpu_custom_call.1} parent=23 // pred_check_branch
          %181 = sbr.rel (%p179) target = $region36
        $region35: #{tpu_custom_call.1} parent=23 // pred_region
          %s183 = ssub.s32 128, 128
          %184 = vsyncadd %s175, %s183
          %s185 = smul.addr %s23, 128
          %s186 = scalar_lea.hbm %s1, %s185
          %s188 = sshll.u32 %s178, 4
          %s189 = int_to_ptr.vmem [resolvable:$true] %s188
          %191 = dma.vmem_to_hbm [thread:$0]  %s189, 128, %s186, %s175
        $region36: #{tpu_custom_call.1} parent=23 // pred_fallthru
          _
      $region24: #{tpu_custom_call.1} parent=5 // pred_fallthru
        _
      %p192 = scmp.le.s32.totalorder 2, %s13
      // Predicated region
      $region37: #{tpu_custom_call.1} parent=5 // pred_check
        %p193 = pneg %p192
      $region38: #{tpu_custom_call.1} parent=5 // pred_check_branch
        %195 = sbr.rel (%p193) target = $region40
      $region39: #{tpu_custom_call.1} parent=5 // pred_region
        %s196 = ssub.s32 %s13, 2
        // Predicated region
        $region41: #{tpu_custom_call.1} parent=39 // pred_check
          %p197 = pneg %p93
        $region42: #{tpu_custom_call.1} parent=39 // pred_check_branch
          %199 = sbr.rel (%p197) target = $region44
        $region43: #{tpu_custom_call.1} parent=39 // pred_region
          %s200 = sand.u32 %s78, 1
          %s201 = scalar_lea.sflag [#allocation4], %s200
          %s202 = sand.u32 %s78, 1
          %s203 = smul.addr %s202, 8
          %s204 = scalar_lea.vmem [#allocation5], %s203
          %205 = dma.done %s201, 128
        $region44: #{tpu_custom_call.1} parent=39 // pred_fallthru
          _
      $region40: #{tpu_custom_call.1} parent=5 // pred_fallthru
        _
    $region6: #{tpu_custom_call.1} parent=1 // loop_footer
      %s17 = sadd.s32 1, %s13
    $region7: #{tpu_custom_call.1} parent=1 // loop_footer_branch
      %12 = sbr.rel target = $region3
    $region8: #{tpu_custom_call.1} parent=1 // loop_exit
      _
    %206 = vsyncpa [#allocation3], 1
    %s207 = scalar_lea.sflag [#allocation3], 1
    %208 = vsyncpa %s207, 1
    %209 = vsyncpa [#allocation4], 1
    %s210 = scalar_lea.sflag [#allocation4], 1
    %211 = vsyncpa %s210, 1

</llo_original>
